<compile_context>
chip_gen: v6e
topology: v6e:2x2x1
jax: 0.10.0
libtpu: 0.0.40
codegen_flags: <defaults>
</compile_context>

<pallas_src>
import math

import jax
import jax.numpy as jnp
from jax.experimental import pallas as pl
from jax.experimental.pallas import tpu as pltpu


def _init_pos_embedding(max_len: int, head_dim: int) -> jnp.ndarray:
    """Deterministic sinusoidal-style init, matching the PyTorch _init_embeddings."""
    position = jnp.arange(max_len, dtype=jnp.float32)[:, None]            # (max_len, 1)
    div_term = jnp.exp(
        jnp.arange(0, head_dim, 2, dtype=jnp.float32)
        * (-math.log(10000.0) / head_dim)
    )                                                                      # (head_dim//2,)
    angles = position * div_term                                           # (max_len, head_dim//2)
    table = jnp.zeros((max_len, head_dim), dtype=jnp.float32)
    table = table.at[:, 0::2].set(jnp.sin(angles))
    table = table.at[:, 1::2].set(jnp.cos(angles))
    return table


def _sublane_multiple(dtype) -> int:
    """Minimum sublane granularity for the dtype (f32 -> 8, bf16 -> 16, int8 -> 32)."""
    itemsize = jnp.dtype(dtype).itemsize
    return max(8, 32 // itemsize)


def _choose_batch_chunk(batch: int, row_bytes: int, sublane: int,
                        target_bytes: int = 2 << 20) -> int:
    """Pick the output block height.

    Must be a multiple of `sublane` OR equal to the full batch (the (8,128)
    BlockSpec rule). Aim for ~target_bytes per output buffer (double-buffered
    by the pipeline), and keep >= 2 grid steps when possible so the parallel
    axis can be sharded across TensorCores on v7x.
    """
    if batch <= sublane:
        return batch  # block dim == full array dim is always legal
    chunk = min(batch, max(1, target_bytes // max(row_bytes, 1)))
    chunk = max(sublane, (chunk // sublane) * sublane)
    if pl.cdiv(batch, chunk) < 2:
        chunk = max(sublane, ((batch // 2) // sublane) * sublane)
    return min(chunk, batch)


def _bcast_kernel(row_ref, out_ref):
    # row_ref: (1, seq_len*head_dim) flattened table slice; constant block index
    #          across the grid, so it is loaded into VMEM once.
    # out_ref: (b_chunk, seq_len*head_dim) output tile; every row of the batch
    #          chunk receives the same embedding row (lane-dense stores).
    out_ref[...] = jnp.broadcast_to(row_ref[...], out_ref.shape)


def learnable_absolute_position(x: jnp.ndarray,
                                pos_table: jnp.ndarray) -> jnp.ndarray:
    """Pallas equivalent of LearnableAbsolutePosition.forward.

    Args:
        x: (batch, seq_len, ...) — only batch and seq_len are used.
        pos_table: (max_len, head_dim) learnable embedding table.
    Returns:
        (batch, seq_len, head_dim) positional embeddings, dtype = pos_table.dtype
        (matches nn.Embedding's output dtype).
    """
    batch, seq_len = int(x.shape[0]), int(x.shape[1])
    max_len, head_dim = pos_table.shape
    if seq_len > max_len:
        raise ValueError(
            f"Sequence length {seq_len} exceeds maximum length {max_len}")

    dtype = pos_table.dtype
    itemsize = jnp.dtype(dtype).itemsize
    flat = seq_len * head_dim

    # Contiguous-arange "gather" + lane-dense flatten: pure layout plumbing in
    # the wrapper (no compute), so the kernel's output last dim is flat wide
    # instead of head_dim wide (avoids masked vst when head_dim < 128).
    row = pos_table[:seq_len].reshape(1, flat)

    b_chunk = _choose_batch_chunk(batch, flat * itemsize,
                                  _sublane_multiple(dtype))
    grid = (pl.cdiv(batch, b_chunk),)

    grid_spec = pltpu.PrefetchScalarGridSpec(
        num_scalar_prefetch=0,
        grid=grid,
        in_specs=[
            # Whole flattened row; constant block index => no re-fetch per step.
            pl.BlockSpec((1, flat), lambda i: (0, 0)),
        ],
        out_specs=pl.BlockSpec((b_chunk, flat), lambda i: (i, 0)),
    )

    out_flat = pl.pallas_call(
        _bcast_kernel,
        out_shape=jax.ShapeDtypeStruct((batch, flat), dtype),
        grid_spec=grid_spec,
        compiler_params=pltpu.CompilerParams(
            dimension_semantics=("parallel",)),
    )(row)

    # Reshape back to the module's (batch, seq_len, head_dim) outside the kernel.
    return out_flat.reshape(batch, seq_len, head_dim)


if __name__ == "__main__":
    head_dim = 32
    max_len = 512
    batch = 2
    seq_len = 8
    feat = 32

    # Parameters (deterministic sinusoidal-style init, as in __init__).
    pos_table = _init_pos_embedding(max_len, head_dim)

    # Example input; only its (batch, seq_len) shape matters.
    x = jax.random.normal(jax.random.PRNGKey(0), (batch, seq_len, feat),
                          dtype=jnp.float32)

    out = learnable_absolute_position(x, pos_table)
    out = jax.block_until_ready(out)

    # Reference check in plain JAX (mirrors the PyTorch forward).
    ref = jnp.broadcast_to(pos_table[:seq_len][None, :, :],
                           (batch, seq_len, head_dim))
    assert out.shape == (batch, seq_len, head_dim)
    assert out.dtype == pos_table.dtype
    assert jnp.allclose(out, ref, atol=1e-6)

    print("KERNEL_OK")
</pallas_src>

<mosaic_0001>
module attributes {stable_mosaic.version = 11 : i64} {
  func.func @_bcast_kernel(%arg0: i32, %arg1: memref<1x256xf32, #tpu.memory_space<vmem>>, %arg2: memref<2x256xf32, #tpu.memory_space<vmem>>) attributes {dimension_semantics = [#tpu.dimension_semantics<parallel>], iteration_bounds = array<i64: 1>, scalar_prefetch = 0 : i64, scratch_operands = 0 : i64, tpu.core_type = #tpu.core_type<tc>, window_params = [{pipeline_mode = #tpu.pipeline_mode<synchronous>, transform_indices = @transform_0, window_bounds = array<i64: 1, 256>}, {transform_indices = @transform_1, window_bounds = array<i64: 2, 256>}]} {
    %c0 = arith.constant 0 : index
    %c0_0 = arith.constant 0 : index
    %0 = vector.load %arg1[%c0, %c0_0] : memref<1x256xf32, #tpu.memory_space<vmem>>, vector<1x256xf32>
    %1 = vector.shape_cast %0 : vector<1x256xf32> to vector<1x256xf32>
    %2 = vector.broadcast %1 : vector<1x256xf32> to vector<2x256xf32>
    %c0_1 = arith.constant 0 : index
    %c0_2 = arith.constant 0 : index
    %3 = vector.load %arg2[%c0_1, %c0_2] : memref<2x256xf32, #tpu.memory_space<vmem>>, vector<2x256xf32>
    tpu.vector_store %arg2[%c0_1, %c0_2], %2 {strides = array<i32>} : memref<2x256xf32, #tpu.memory_space<vmem>>, vector<2x256xf32>,
    return
  }
  func.func @transform_0(%arg0: i32) -> (i32, i32) {
    %c0_i32 = arith.constant 0 : i32
    %c0_i32_0 = arith.constant 0 : i32
    %c0_i32_1 = arith.constant 0 : i32
    return %c0_i32, %c0_i32_0 : i32, i32
  }
  func.func @transform_1(%arg0: i32) -> (i32, i32) {
    %c0_i32 = arith.constant 0 : i32
    %c0_i32_0 = arith.constant 0 : i32
    return %arg0, %c0_i32 : i32, i32
  }
}

</mosaic_0001>

<llo_original>
// kernel: tpu_custom_call.1
$region0: #{tpu_custom_call.1}
  #allocation0 [shape = 'u32[]', space=smem, size = 0x4, offset = 0x4, fixed_abs, tag = 'smem constant byte address 0x4 - core index']
  #allocation1 [shape = 'u32[144,128]{1,0:T(1,128)}', space=vmem, size = 0x12000, scoped, tag = 'internal scratch']
  %s0 = inlined_call_operand.hbm [shape: f32[1,256], index: 0, kind: input, shape index: {}]
  %s1 = inlined_call_operand.hbm [shape: f32[2,256], index: 1, kind: output, shape index: {}]
  %s2 = sld [smem:[#allocation0]]
  $region18: #{tpu_custom_call.1} parent=0
    _
  %s4 = ssub.s32 1, %s2
  %s5 = scalar_select 0, %s4, %s2
  $region1: #{tpu_custom_call.1} parent=0
    #allocation2 [shape = 'u8[1024]{0}', space=vmem, size = 0x400, scoped, tag = 'input window, operand 0, single buffered']
    #allocation3 [shape = 's32[1]{0}', space=sflag, size = 0x4, scoped, tag = 'scoped memory for tpu_custom_call.1']
    #allocation4 [shape = 's32[1]{0}', space=sflag, size = 0x4, scoped, tag = 'scoped memory for tpu_custom_call.1']
    #allocation5 [shape = 'u8[2048]{0}', space=vmem, size = 0x800, scoped, tag = 'output window, operand 0, single buffered']
    %6 = vsyncpa [#allocation3], 0
    %7 = vsyncpa [#allocation4], 0
    // Predicated region
    $region2: #{tpu_custom_call.1} parent=1 // pred_check
      _
    $region3: #{tpu_custom_call.1} parent=1 // pred_check_branch
      %9 = sbr.rel (0) target = $region5
    $region4: #{tpu_custom_call.1} parent=1 // pred_region
      %s11 = ssub.s32 32, 32
      %12 = vsyncadd [#allocation3], %s11
      %s14 = sshll.u32 [#allocation2], 4
      %s15 = int_to_ptr.vmem [resolvable:$true] %s14
      %17 = dma.hbm_to_vmem [thread:$0]  %s0, 32, %s15, [#allocation3]
    $region5: #{tpu_custom_call.1} parent=1 // pred_fallthru
      _
    // Predicated region
    $region6: #{tpu_custom_call.1} parent=1 // pred_check
      _
    $region7: #{tpu_custom_call.1} parent=1 // pred_check_branch
      %19 = sbr.rel (0) target = $region9
    $region8: #{tpu_custom_call.1} parent=1 // pred_region
      %20 = dma.done [#allocation3], 32
    $region9: #{tpu_custom_call.1} parent=1 // pred_fallthru
      _
    %v21 = vld [vmem:[#allocation2] sm:$0x3]
    %v23 = vlaneseq
    %v24 = vshrl.u32 %v23, 7
    %v25 = vsub.s32 0, %v24
    %v26 = vrot.slane %v21, %v25
    %v27 = vlaneseq
    %v28 = vshrl.u32 %v27, 7
    %v29 = vsub.s32 1, %v28
    %v30 = vrot.slane %v21, %v29
    %v31 = vcombine.low %v26, %v30
    %v33 = vunpack.c.l.s4 1983009808
    %v34 = vunpack.c.0.s8 %v33
    %v35 = vlaneseq
    %v36 = vshrl.u32 %v35, 7
    %v37 = vsub.s32 %v34, %v36
    %v38 = vrot.slane %v31, %v37
    %40 = vst [vmem:[#allocation5] sm:$0xf] %v38
    // Predicated region
    $region10: #{tpu_custom_call.1} parent=1 // pred_check
      _
    $region11: #{tpu_custom_call.1} parent=1 // pred_check_branch
      %42 = sbr.rel (0) target = $region13
    $region12: #{tpu_custom_call.1} parent=1 // pred_region
      %s44 = ssub.s32 64, 64
      %45 = vsyncadd [#allocation4], %s44
      %s47 = sshll.u32 [#allocation5], 4
      %s48 = int_to_ptr.vmem [resolvable:$true] %s47
      %50 = dma.vmem_to_hbm [thread:$0]  %s48, 64, %s1, [#allocation4]
    $region13: #{tpu_custom_call.1} parent=1 // pred_fallthru
      _
    // Predicated region
    $region14: #{tpu_custom_call.1} parent=1 // pred_check
      _
    $region15: #{tpu_custom_call.1} parent=1 // pred_check_branch
      %52 = sbr.rel (0) target = $region17
    $region16: #{tpu_custom_call.1} parent=1 // pred_region
      %53 = dma.done [#allocation4], 64
    $region17: #{tpu_custom_call.1} parent=1 // pred_fallthru
      _
    %54 = vsyncpa [#allocation3], 1
    %55 = vsyncpa [#allocation4], 1

</llo_original>
